<compile_context>
chip_gen: v7x
topology: tpu7x:2x2x1
jax: 0.10.0
libtpu: 0.0.40
codegen_flags: <defaults>
</compile_context>

<pallas_src>
import math

import jax
import jax.numpy as jnp
from jax import lax
from jax.experimental import pallas as pl
from jax.experimental.pallas import tpu as pltpu

# ---------------- problem sizes (small, deterministic) ----------------
B = 4         # batch of graphs (grid axis; parallel across TCs on v7x)
N = 16        # number of graph nodes ("sequence length" for the transformer)
F_IN = 32     # input node feature dim
D = 32        # GCN hidden dim == transformer d_model
FF = 64       # transformer feed-forward dim
VOCAB = 32    # output "summary" vocab size
OUT_PAD = 128 # lane-dense output width (padded head; sliced back in wrapper)
LN_EPS = 1e-5

# ---------------- packed-slab layout ----------------
# weight slab: bf16 [W_ROWS, 128], weights stacked along sublanes, zero-padded lanes
_R_W1, _R_W2, _R_QKV, _R_WO, _R_F1, _R_F2, _R_OUT = 0, 32, 64, 96, 128, 160, 224
W_ROWS = 256
# bias/LN slab: f32 [B_ROWS, 128], one row per vector, zero-padded lanes
(_B_B1, _B_B2, _B_QKV, _B_BO, _B_F1, _B_F2, _B_OUT,
 _B_LN1G, _B_LN1B, _B_LN2G, _B_LN2B) = range(11)
B_ROWS = 16


# ---------------- Pallas kernel: whole forward pass for one graph ----------------
def custom_model_kernel(a_ref, x_ref, w_ref, b_ref, out_ref):
    f32 = jnp.float32
    bf16 = jnp.bfloat16

    def mm(lhs, rhs):
        # MXU matmul: bf16 operands, f32 accumulation.
        return jnp.dot(lhs.astype(bf16), rhs.astype(bf16),
                       preferred_element_type=f32)

    def mm_t(lhs, rhs):
        # q @ k.T without materializing a transpose: contract both lane axes.
        return lax.dot_general(lhs.astype(bf16), rhs.astype(bf16),
                               dimension_numbers=(((1,), (1,)), ((), ())),
                               preferred_element_type=f32)

    def layer_norm(h, g, beta):
        mu = jnp.mean(h, axis=-1, keepdims=True)
        xc = h - mu
        var = jnp.mean(xc * xc, axis=-1, keepdims=True)
        return xc * lax.rsqrt(var + LN_EPS) * g + beta

    a = a_ref[0]                       # [N, N]    normalized adjacency (f32)
    x = x_ref[0]                       # [N, F_IN] node features        (f32)

    # -------- parameters: static slices of the two packed slabs --------
    w1   = w_ref[_R_W1:_R_W1 + F_IN, 0:D]
    w2   = w_ref[_R_W2:_R_W2 + D,    0:D]
    wqkv = w_ref[_R_QKV:_R_QKV + D,  0:3 * D]
    wo   = w_ref[_R_WO:_R_WO + D,    0:D]
    wf1  = w_ref[_R_F1:_R_F1 + D,    0:FF]
    wf2  = w_ref[_R_F2:_R_F2 + FF,   0:D]
    wout = w_ref[_R_OUT:_R_OUT + D, :]            # [D, OUT_PAD] zero-padded head

    b1   = b_ref[_B_B1:_B_B1 + 1,     0:D]
    b2   = b_ref[_B_B2:_B_B2 + 1,     0:D]
    bqkv = b_ref[_B_QKV:_B_QKV + 1,   0:3 * D]
    bo   = b_ref[_B_BO:_B_BO + 1,     0:D]
    bf1  = b_ref[_B_F1:_B_F1 + 1,     0:FF]
    bf2  = b_ref[_B_F2:_B_F2 + 1,     0:D]
    bout = b_ref[_B_OUT:_B_OUT + 1, :]            # [1, OUT_PAD] zero-padded
    ln1g = b_ref[_B_LN1G:_B_LN1G + 1, 0:D]
    ln1b = b_ref[_B_LN1B:_B_LN1B + 1, 0:D]
    ln2g = b_ref[_B_LN2G:_B_LN2G + 1, 0:D]
    ln2b = b_ref[_B_LN2B:_B_LN2B + 1, 0:D]

    # -------- GNN (2-layer GCN) --------
    h1  = jnp.maximum(mm(a, mm(x, w1)) + b1, 0.0)        # [N, D]
    emb = mm(a, mm(h1, w2)) + b2                         # [N, D]

    # -------- Transformer encoder layer (post-LN, single head) --------
    qkv = mm(emb, wqkv) + bqkv                           # fused QKV  [N, 3D]
    q = qkv[:, 0:D]
    k = qkv[:, D:2 * D]
    v = qkv[:, 2 * D:3 * D]

    scores = mm_t(q, k) * (1.0 / math.sqrt(D))           # [N, N]
    scores = scores - jnp.max(scores, axis=-1, keepdims=True)
    p = jnp.exp(scores)
    p = p * pl.reciprocal(jnp.sum(p, axis=-1, keepdims=True), approx=True)

    attn = mm(mm(p, v), wo) + bo                         # [N, D]
    h = layer_norm(emb + attn, ln1g, ln1b)               # residual + LN1

    ff = jnp.maximum(mm(h, wf1) + bf1, 0.0)              # [N, FF]
    h = layer_norm(h + mm(ff, wf2) + bf2, ln2g, ln2b)    # residual + LN2

    # -------- summary head (128-lane padded -> unmasked lane-dense store) ----
    out_ref[0] = mm(h, wout) + bout                      # [N, OUT_PAD]


# ---------------- wrapper ----------------
def custom_model_forward(a, x, w_slab, b_slab):
    batch = a.shape[0]
    out = pl.pallas_call(
        custom_model_kernel,
        out_shape=jax.ShapeDtypeStruct((batch, N, OUT_PAD), jnp.float32),
        grid=(batch,),
        in_specs=[
            pl.BlockSpec((1, N, N), lambda b: (b, 0, 0)),
            pl.BlockSpec((1, N, F_IN), lambda b: (b, 0, 0)),
            pl.BlockSpec((W_ROWS, 128), lambda b: (0, 0)),   # same block every step
            pl.BlockSpec((B_ROWS, 128), lambda b: (0, 0)),   # -> no re-DMA
        ],
        out_specs=pl.BlockSpec((1, N, OUT_PAD), lambda b: (b, 0, 0)),
        compiler_params=pltpu.CompilerParams(
            dimension_semantics=("parallel",),
            vmem_limit_bytes=32 * 1024 * 1024,
        ),
    )(a, x, w_slab, b_slab)
    return out[:, :, :VOCAB]


# ---------------- deterministic parameter / input construction ----------------
def make_params(key):
    keys = jax.random.split(key, 13)

    def lin(k, fan_in, shape):
        return jax.random.normal(k, shape, jnp.float32) / math.sqrt(fan_in)

    w1 = lin(keys[0], F_IN, (F_IN, D));  b1 = jnp.zeros((1, D), jnp.float32)
    w2 = lin(keys[1], D, (D, D));        b2 = jnp.zeros((1, D), jnp.float32)
    wq = lin(keys[2], D, (D, D));        bq = jnp.zeros((1, D), jnp.float32)
    wk = lin(keys[3], D, (D, D));        bk = jnp.zeros((1, D), jnp.float32)
    wv = lin(keys[4], D, (D, D));        bv = jnp.zeros((1, D), jnp.float32)
    wo = lin(keys[5], D, (D, D));        bo = jnp.zeros((1, D), jnp.float32)
    ln1g = jnp.ones((1, D), jnp.float32);  ln1b = jnp.zeros((1, D), jnp.float32)
    wf1 = lin(keys[6], D, (D, FF));      bf1 = jnp.zeros((1, FF), jnp.float32)
    wf2 = lin(keys[7], FF, (FF, D));     bf2 = jnp.zeros((1, D), jnp.float32)
    ln2g = jnp.ones((1, D), jnp.float32);  ln2b = jnp.zeros((1, D), jnp.float32)
    wout = lin(keys[8], D, (D, VOCAB));  bout = jnp.zeros((1, VOCAB), jnp.float32)

    return (w1, b1, w2, b2,
            wq, bq, wk, bk, wv, bv, wo, bo,
            ln1g, ln1b,
            wf1, bf1, wf2, bf2,
            ln2g, ln2b,
            wout, bout)


def pack_params(params):
    (w1, b1, w2, b2, wq, bq, wk, bk, wv, bv, wo, bo,
     ln1g, ln1b, wf1, bf1, wf2, bf2, ln2g, ln2b, wout, bout) = params

    w_slab = jnp.zeros((W_ROWS, 128), jnp.float32)

    def put_w(slab, row, w):
        r, c = w.shape
        return slab.at[row:row + r, 0:c].set(w)

    w_slab = put_w(w_slab, _R_W1, w1)
    w_slab = put_w(w_slab, _R_W2, w2)
    w_slab = put_w(w_slab, _R_QKV, jnp.concatenate([wq, wk, wv], axis=1))
    w_slab = put_w(w_slab, _R_WO, wo)
    w_slab = put_w(w_slab, _R_F1, wf1)
    w_slab = put_w(w_slab, _R_F2, wf2)
    w_slab = put_w(w_slab, _R_OUT, wout)
    w_slab = w_slab.astype(jnp.bfloat16)           # bf16 MXU operands

    b_slab = jnp.zeros((B_ROWS, 128), jnp.float32)

    def put_b(slab, row, b):
        b = b.reshape(-1)
        return slab.at[row, 0:b.shape[0]].set(b)

    b_slab = put_b(b_slab, _B_B1, b1)
    b_slab = put_b(b_slab, _B_B2, b2)
    b_slab = put_b(b_slab, _B_QKV, jnp.concatenate([bq, bk, bv], axis=1))
    b_slab = put_b(b_slab, _B_BO, bo)
    b_slab = put_b(b_slab, _B_F1, bf1)
    b_slab = put_b(b_slab, _B_F2, bf2)
    b_slab = put_b(b_slab, _B_OUT, bout)
    b_slab = put_b(b_slab, _B_LN1G, ln1g)
    b_slab = put_b(b_slab, _B_LN1B, ln1b)
    b_slab = put_b(b_slab, _B_LN2G, ln2g)
    b_slab = put_b(b_slab, _B_LN2B, ln2b)
    return w_slab, b_slab


def make_graph_batch(key):
    # node features for B graphs
    x = jax.random.normal(key, (B, N, F_IN), jnp.float32)
    # ring graph with self loops, symmetrically normalized (GCN-style A_hat)
    idx = jnp.arange(N)
    adj = (jnp.eye(N)
           + jnp.eye(N)[(idx + 1) % N]
           + jnp.eye(N)[(idx - 1) % N]).astype(jnp.float32)
    deg = jnp.sum(adj, axis=-1)
    d_inv_sqrt = 1.0 / jnp.sqrt(deg)
    a_hat = adj * d_inv_sqrt[:, None] * d_inv_sqrt[None, :]
    a_hat = jnp.broadcast_to(a_hat, (B, N, N)).astype(jnp.float32)
    return a_hat, x


# ---------------- pure-JAX f32 reference (for sanity checking) ----------------
def reference_forward(a, x, params):
    (w1, b1, w2, b2, wq, bq, wk, bk, wv, bv, wo, bo,
     ln1g, ln1b, wf1, bf1, wf2, bf2, ln2g, ln2b, wout, bout) = params

    def ln(h, g, be):
        mu = h.mean(-1, keepdims=True)
        xc = h - mu
        var = (xc * xc).mean(-1, keepdims=True)
        return xc * lax.rsqrt(var + LN_EPS) * g + be

    def single(a1, x1):
        h1 = jax.nn.relu(a1 @ (x1 @ w1) + b1)
        emb = a1 @ (h1 @ w2) + b2
        q = emb @ wq + bq
        k = emb @ wk + bk
        v = emb @ wv + bv
        p = jax.nn.softmax((q @ k.T) / math.sqrt(D), axis=-1)
        attn = (p @ v) @ wo + bo
        h = ln(emb + attn, ln1g, ln1b)
        ff = jax.nn.relu(h @ wf1 + bf1) @ wf2 + bf2
        h = ln(h + ff, ln2g, ln2b)
        return h @ wout + bout

    return jax.vmap(single)(a, x)


if __name__ == "__main__":
    key = jax.random.PRNGKey(0)
    k_graph, k_params = jax.random.split(key)

    a_hat, x = make_graph_batch(k_graph)
    params = make_params(k_params)
    w_slab, b_slab = pack_params(params)

    summary_logits = jax.jit(custom_model_forward)(a_hat, x, w_slab, b_slab)
    jax.block_until_ready(summary_logits)

    assert summary_logits.shape == (B, N, VOCAB)
    assert bool(jnp.all(jnp.isfinite(summary_logits)))

    # Loose sanity check vs. f32 reference (kernel uses bf16 MXU operands).
    ref = reference_forward(a_hat, x, params)
    max_err = float(jnp.max(jnp.abs(summary_logits - ref)))
    assert max_err < 0.5, f"max abs err vs f32 reference = {max_err}"

    print("KERNEL_OK")
</pallas_src>

<mosaic_0001>
module attributes {stable_mosaic.version = 11 : i64} {
  func.func @custom_model_kernel(%arg0: i32, %arg1: memref<1x16x16xf32, #tpu.memory_space<vmem>>, %arg2: memref<1x16x32xf32, #tpu.memory_space<vmem>>, %arg3: memref<256x128xbf16, #tpu.memory_space<vmem>>, %arg4: memref<16x128xf32, #tpu.memory_space<vmem>>, %arg5: memref<1x16x128xf32, #tpu.memory_space<vmem>>) attributes {dimension_semantics = [#tpu.dimension_semantics<parallel>], iteration_bounds = array<i64: 4>, scalar_prefetch = 0 : i64, scratch_operands = 0 : i64, tpu.core_type = #tpu.core_type<tc>, window_params = [{transform_indices = @transform_0, window_bounds = array<i64: 1, 16, 16>}, {transform_indices = @transform_1, window_bounds = array<i64: 1, 16, 32>}, {pipeline_mode = #tpu.pipeline_mode<synchronous>, transform_indices = @transform_2, window_bounds = array<i64: 256, 128>}, {pipeline_mode = #tpu.pipeline_mode<synchronous>, transform_indices = @transform_3, window_bounds = array<i64: 16, 128>}, {transform_indices = @transform_4, window_bounds = array<i64: 1, 16, 128>}]} {
    %c0 = arith.constant 0 : index
    %c0_0 = arith.constant 0 : index
    %c0_1 = arith.constant 0 : index
    %0 = vector.load %arg1[%c0, %c0_0, %c0_1] : memref<1x16x16xf32, #tpu.memory_space<vmem>>, vector<1x16x16xf32>
    %1 = vector.shape_cast %0 : vector<1x16x16xf32> to vector<16x16xf32>
    %c0_2 = arith.constant 0 : index
    %c0_3 = arith.constant 0 : index
    %c0_4 = arith.constant 0 : index
    %2 = vector.load %arg2[%c0_2, %c0_3, %c0_4] : memref<1x16x32xf32, #tpu.memory_space<vmem>>, vector<1x16x32xf32>
    %3 = vector.shape_cast %2 : vector<1x16x32xf32> to vector<16x32xf32>
    %c0_5 = arith.constant 0 : index
    %c0_6 = arith.constant 0 : index
    %4 = vector.load %arg3[%c0_5, %c0_6] : memref<256x128xbf16, #tpu.memory_space<vmem>>, vector<32x32xbf16>
    %c32 = arith.constant 32 : index
    %c0_7 = arith.constant 0 : index
    %5 = vector.load %arg3[%c32, %c0_7] : memref<256x128xbf16, #tpu.memory_space<vmem>>, vector<32x32xbf16>
    %c64 = arith.constant 64 : index
    %c0_8 = arith.constant 0 : index
    %6 = vector.load %arg3[%c64, %c0_8] : memref<256x128xbf16, #tpu.memory_space<vmem>>, vector<32x96xbf16>
    %c96 = arith.constant 96 : index
    %c0_9 = arith.constant 0 : index
    %7 = vector.load %arg3[%c96, %c0_9] : memref<256x128xbf16, #tpu.memory_space<vmem>>, vector<32x32xbf16>
    %c128 = arith.constant 128 : index
    %c0_10 = arith.constant 0 : index
    %8 = vector.load %arg3[%c128, %c0_10] : memref<256x128xbf16, #tpu.memory_space<vmem>>, vector<32x64xbf16>
    %c160 = arith.constant 160 : index
    %c0_11 = arith.constant 0 : index
    %9 = vector.load %arg3[%c160, %c0_11] : memref<256x128xbf16, #tpu.memory_space<vmem>>, vector<64x32xbf16>
    %c224 = arith.constant 224 : index
    %c0_12 = arith.constant 0 : index
    %10 = vector.load %arg3[%c224, %c0_12] : memref<256x128xbf16, #tpu.memory_space<vmem>>, vector<32x128xbf16>
    %c0_13 = arith.constant 0 : index
    %c0_14 = arith.constant 0 : index
    %11 = vector.load %arg4[%c0_13, %c0_14] : memref<16x128xf32, #tpu.memory_space<vmem>>, vector<1x32xf32>
    %c1 = arith.constant 1 : index
    %c0_15 = arith.constant 0 : index
    %12 = vector.load %arg4[%c1, %c0_15] : memref<16x128xf32, #tpu.memory_space<vmem>>, vector<1x32xf32>
    %c2 = arith.constant 2 : index
    %c0_16 = arith.constant 0 : index
    %13 = vector.load %arg4[%c2, %c0_16] : memref<16x128xf32, #tpu.memory_space<vmem>>, vector<1x96xf32>
    %c3 = arith.constant 3 : index
    %c0_17 = arith.constant 0 : index
    %14 = vector.load %arg4[%c3, %c0_17] : memref<16x128xf32, #tpu.memory_space<vmem>>, vector<1x32xf32>
    %c4 = arith.constant 4 : index
    %c0_18 = arith.constant 0 : index
    %15 = vector.load %arg4[%c4, %c0_18] : memref<16x128xf32, #tpu.memory_space<vmem>>, vector<1x64xf32>
    %c5 = arith.constant 5 : index
    %c0_19 = arith.constant 0 : index
    %16 = vector.load %arg4[%c5, %c0_19] : memref<16x128xf32, #tpu.memory_space<vmem>>, vector<1x32xf32>
    %c6 = arith.constant 6 : index
    %c0_20 = arith.constant 0 : index
    %17 = vector.load %arg4[%c6, %c0_20] : memref<16x128xf32, #tpu.memory_space<vmem>>, vector<1x128xf32>
    %c7 = arith.constant 7 : index
    %c0_21 = arith.constant 0 : index
    %18 = vector.load %arg4[%c7, %c0_21] : memref<16x128xf32, #tpu.memory_space<vmem>>, vector<1x32xf32>
    %c8 = arith.constant 8 : index
    %c0_22 = arith.constant 0 : index
    %19 = vector.load %arg4[%c8, %c0_22] : memref<16x128xf32, #tpu.memory_space<vmem>>, vector<1x32xf32>
    %c9 = arith.constant 9 : index
    %c0_23 = arith.constant 0 : index
    %20 = vector.load %arg4[%c9, %c0_23] : memref<16x128xf32, #tpu.memory_space<vmem>>, vector<1x32xf32>
    %c10 = arith.constant 10 : index
    %c0_24 = arith.constant 0 : index
    %21 = vector.load %arg4[%c10, %c0_24] : memref<16x128xf32, #tpu.memory_space<vmem>>, vector<1x32xf32>
    %22 = arith.truncf %3 : vector<16x32xf32> to vector<16x32xbf16>
    %cst = arith.constant dense<0.000000e+00> : vector<16x32xf32>
    %23 = tpu.matmul %22, %4, %cst {dimension_numbers = #tpu.dot_dimension_numbers<[1], [0], [0], [1], [0, 0, 1, 1], [], []>} : vector<16x32xbf16>, vector<32x32xbf16>, vector<16x32xf32> -> vector<16x32xf32>
    %24 = arith.truncf %1 : vector<16x16xf32> to vector<16x16xbf16>
    %25 = arith.truncf %23 : vector<16x32xf32> to vector<16x32xbf16>
    %cst_25 = arith.constant dense<0.000000e+00> : vector<16x32xf32>
    %26 = tpu.matmul %24, %25, %cst_25 {dimension_numbers = #tpu.dot_dimension_numbers<[1], [0], [0], [1], [0, 0, 1, 1], [], []>} : vector<16x16xbf16>, vector<16x32xbf16>, vector<16x32xf32> -> vector<16x32xf32>
    %27 = vector.broadcast %11 : vector<1x32xf32> to vector<16x32xf32>
    %28 = arith.addf %26, %27 : vector<16x32xf32>
    %cst_26 = arith.constant 0.000000e+00 : f32
    %29 = vector.broadcast %cst_26 : f32 to vector<16x32xf32>
    %30 = arith.maximumf %28, %29 : vector<16x32xf32>
    %31 = arith.truncf %30 : vector<16x32xf32> to vector<16x32xbf16>
    %cst_27 = arith.constant dense<0.000000e+00> : vector<16x32xf32>
    %32 = tpu.matmul %31, %5, %cst_27 {dimension_numbers = #tpu.dot_dimension_numbers<[1], [0], [0], [1], [0, 0, 1, 1], [], []>} : vector<16x32xbf16>, vector<32x32xbf16>, vector<16x32xf32> -> vector<16x32xf32>
    %33 = arith.truncf %1 : vector<16x16xf32> to vector<16x16xbf16>
    %34 = arith.truncf %32 : vector<16x32xf32> to vector<16x32xbf16>
    %cst_28 = arith.constant dense<0.000000e+00> : vector<16x32xf32>
    %35 = tpu.matmul %33, %34, %cst_28 {dimension_numbers = #tpu.dot_dimension_numbers<[1], [0], [0], [1], [0, 0, 1, 1], [], []>} : vector<16x16xbf16>, vector<16x32xbf16>, vector<16x32xf32> -> vector<16x32xf32>
    %36 = vector.broadcast %12 : vector<1x32xf32> to vector<16x32xf32>
    %37 = arith.addf %35, %36 : vector<16x32xf32>
    %38 = arith.truncf %37 : vector<16x32xf32> to vector<16x32xbf16>
    %cst_29 = arith.constant dense<0.000000e+00> : vector<16x96xf32>
    %39 = tpu.matmul %38, %6, %cst_29 {dimension_numbers = #tpu.dot_dimension_numbers<[1], [0], [0], [1], [0, 0, 1, 1], [], []>} : vector<16x32xbf16>, vector<32x96xbf16>, vector<16x96xf32> -> vector<16x96xf32>
    %40 = vector.broadcast %13 : vector<1x96xf32> to vector<16x96xf32>
    %41 = arith.addf %39, %40 : vector<16x96xf32>
    %42 = vector.extract_strided_slice %41 {offsets = [0, 0], sizes = [16, 32], strides = [1, 1]} : vector<16x96xf32> to vector<16x32xf32>
    %43 = vector.extract_strided_slice %41 {offsets = [0, 32], sizes = [16, 32], strides = [1, 1]} : vector<16x96xf32> to vector<16x32xf32>
    %44 = vector.extract_strided_slice %41 {offsets = [0, 64], sizes = [16, 32], strides = [1, 1]} : vector<16x96xf32> to vector<16x32xf32>
    %45 = arith.truncf %42 : vector<16x32xf32> to vector<16x32xbf16>
    %46 = arith.truncf %43 : vector<16x32xf32> to vector<16x32xbf16>
    %cst_30 = arith.constant dense<0.000000e+00> : vector<16x16xf32>
    %47 = tpu.matmul %45, %46, %cst_30 {dimension_numbers = #tpu.dot_dimension_numbers<[1], [1], [0], [0], [0, 0, 1, 0], [], []>} : vector<16x32xbf16>, vector<16x32xbf16>, vector<16x16xf32> -> vector<16x16xf32>
    %cst_31 = arith.constant 0.176776692 : f32
    %48 = vector.broadcast %cst_31 : f32 to vector<16x16xf32>
    %49 = arith.mulf %47, %48 : vector<16x16xf32>
    %cst_32 = arith.constant dense<0xFF800000> : vector<16xf32>
    %50 = vector.multi_reduction <maximumf>, %49, %cst_32 [1] : vector<16x16xf32> to vector<16xf32>
    %51 = vector.shape_cast %50 : vector<16xf32> to vector<16x1xf32>
    %52 = vector.broadcast %51 : vector<16x1xf32> to vector<16x16xf32>
    %53 = arith.subf %49, %52 : vector<16x16xf32>
    %54 = math.exp %53 : vector<16x16xf32>
    %cst_33 = arith.constant dense<0.000000e+00> : vector<16xf32>
    %55 = vector.multi_reduction <add>, %54, %cst_33 [1] : vector<16x16xf32> to vector<16xf32>
    %56 = vector.shape_cast %55 : vector<16xf32> to vector<16x1xf32>
    %57 = tpu.reciprocal %56 {approx = true} : vector<16x1xf32> -> vector<16x1xf32>
    %58 = vector.broadcast %57 : vector<16x1xf32> to vector<16x16xf32>
    %59 = arith.mulf %54, %58 : vector<16x16xf32>
    %60 = arith.truncf %59 : vector<16x16xf32> to vector<16x16xbf16>
    %61 = arith.truncf %44 : vector<16x32xf32> to vector<16x32xbf16>
    %cst_34 = arith.constant dense<0.000000e+00> : vector<16x32xf32>
    %62 = tpu.matmul %60, %61, %cst_34 {dimension_numbers = #tpu.dot_dimension_numbers<[1], [0], [0], [1], [0, 0, 1, 1], [], []>} : vector<16x16xbf16>, vector<16x32xbf16>, vector<16x32xf32> -> vector<16x32xf32>
    %63 = arith.truncf %62 : vector<16x32xf32> to vector<16x32xbf16>
    %cst_35 = arith.constant dense<0.000000e+00> : vector<16x32xf32>
    %64 = tpu.matmul %63, %7, %cst_35 {dimension_numbers = #tpu.dot_dimension_numbers<[1], [0], [0], [1], [0, 0, 1, 1], [], []>} : vector<16x32xbf16>, vector<32x32xbf16>, vector<16x32xf32> -> vector<16x32xf32>
    %65 = vector.broadcast %14 : vector<1x32xf32> to vector<16x32xf32>
    %66 = arith.addf %64, %65 : vector<16x32xf32>
    %67 = arith.addf %37, %66 : vector<16x32xf32>
    %cst_36 = arith.constant dense<0.000000e+00> : vector<16xf32>
    %68 = vector.multi_reduction <add>, %67, %cst_36 [1] : vector<16x32xf32> to vector<16xf32>
    %69 = vector.shape_cast %68 : vector<16xf32> to vector<16x1xf32>
    %cst_37 = arith.constant 3.200000e+01 : f32
    %70 = vector.broadcast %cst_37 : f32 to vector<16x1xf32>
    %71 = arith.divf %69, %70 : vector<16x1xf32>
    %72 = vector.broadcast %71 : vector<16x1xf32> to vector<16x32xf32>
    %73 = arith.subf %67, %72 : vector<16x32xf32>
    %74 = arith.mulf %73, %73 : vector<16x32xf32>
    %cst_38 = arith.constant dense<0.000000e+00> : vector<16xf32>
    %75 = vector.multi_reduction <add>, %74, %cst_38 [1] : vector<16x32xf32> to vector<16xf32>
    %76 = vector.shape_cast %75 : vector<16xf32> to vector<16x1xf32>
    %cst_39 = arith.constant 3.200000e+01 : f32
    %77 = vector.broadcast %cst_39 : f32 to vector<16x1xf32>
    %78 = arith.divf %76, %77 : vector<16x1xf32>
    %cst_40 = arith.constant 9.99999974E-6 : f32
    %79 = vector.broadcast %cst_40 : f32 to vector<16x1xf32>
    %80 = arith.addf %78, %79 : vector<16x1xf32>
    %81 = math.rsqrt %80 : vector<16x1xf32>
    %82 = vector.broadcast %81 : vector<16x1xf32> to vector<16x32xf32>
    %83 = arith.mulf %73, %82 : vector<16x32xf32>
    %84 = vector.broadcast %18 : vector<1x32xf32> to vector<16x32xf32>
    %85 = arith.mulf %83, %84 : vector<16x32xf32>
    %86 = vector.broadcast %19 : vector<1x32xf32> to vector<16x32xf32>
    %87 = arith.addf %85, %86 : vector<16x32xf32>
    %88 = arith.truncf %87 : vector<16x32xf32> to vector<16x32xbf16>
    %cst_41 = arith.constant dense<0.000000e+00> : vector<16x64xf32>
    %89 = tpu.matmul %88, %8, %cst_41 {dimension_numbers = #tpu.dot_dimension_numbers<[1], [0], [0], [1], [0, 0, 1, 1], [], []>} : vector<16x32xbf16>, vector<32x64xbf16>, vector<16x64xf32> -> vector<16x64xf32>
    %90 = vector.broadcast %15 : vector<1x64xf32> to vector<16x64xf32>
    %91 = arith.addf %89, %90 : vector<16x64xf32>
    %cst_42 = arith.constant 0.000000e+00 : f32
    %92 = vector.broadcast %cst_42 : f32 to vector<16x64xf32>
    %93 = arith.maximumf %91, %92 : vector<16x64xf32>
    %94 = arith.truncf %93 : vector<16x64xf32> to vector<16x64xbf16>
    %cst_43 = arith.constant dense<0.000000e+00> : vector<16x32xf32>
    %95 = tpu.matmul %94, %9, %cst_43 {dimension_numbers = #tpu.dot_dimension_numbers<[1], [0], [0], [1], [0, 0, 1, 1], [], []>} : vector<16x64xbf16>, vector<64x32xbf16>, vector<16x32xf32> -> vector<16x32xf32>
    %96 = arith.addf %87, %95 : vector<16x32xf32>
    %97 = vector.broadcast %16 : vector<1x32xf32> to vector<16x32xf32>
    %98 = arith.addf %96, %97 : vector<16x32xf32>
    %cst_44 = arith.constant dense<0.000000e+00> : vector<16xf32>
    %99 = vector.multi_reduction <add>, %98, %cst_44 [1] : vector<16x32xf32> to vector<16xf32>
    %100 = vector.shape_cast %99 : vector<16xf32> to vector<16x1xf32>
    %cst_45 = arith.constant 3.200000e+01 : f32
    %101 = vector.broadcast %cst_45 : f32 to vector<16x1xf32>
    %102 = arith.divf %100, %101 : vector<16x1xf32>
    %103 = vector.broadcast %102 : vector<16x1xf32> to vector<16x32xf32>
    %104 = arith.subf %98, %103 : vector<16x32xf32>
    %105 = arith.mulf %104, %104 : vector<16x32xf32>
    %cst_46 = arith.constant dense<0.000000e+00> : vector<16xf32>
    %106 = vector.multi_reduction <add>, %105, %cst_46 [1] : vector<16x32xf32> to vector<16xf32>
    %107 = vector.shape_cast %106 : vector<16xf32> to vector<16x1xf32>
    %cst_47 = arith.constant 3.200000e+01 : f32
    %108 = vector.broadcast %cst_47 : f32 to vector<16x1xf32>
    %109 = arith.divf %107, %108 : vector<16x1xf32>
    %cst_48 = arith.constant 9.99999974E-6 : f32
    %110 = vector.broadcast %cst_48 : f32 to vector<16x1xf32>
    %111 = arith.addf %109, %110 : vector<16x1xf32>
    %112 = math.rsqrt %111 : vector<16x1xf32>
    %113 = vector.broadcast %112 : vector<16x1xf32> to vector<16x32xf32>
    %114 = arith.mulf %104, %113 : vector<16x32xf32>
    %115 = vector.broadcast %20 : vector<1x32xf32> to vector<16x32xf32>
    %116 = arith.mulf %114, %115 : vector<16x32xf32>
    %117 = vector.broadcast %21 : vector<1x32xf32> to vector<16x32xf32>
    %118 = arith.addf %116, %117 : vector<16x32xf32>
    %119 = arith.truncf %118 : vector<16x32xf32> to vector<16x32xbf16>
    %cst_49 = arith.constant dense<0.000000e+00> : vector<16x128xf32>
    %120 = tpu.matmul %119, %10, %cst_49 {dimension_numbers = #tpu.dot_dimension_numbers<[1], [0], [0], [1], [0, 0, 1, 1], [], []>} : vector<16x32xbf16>, vector<32x128xbf16>, vector<16x128xf32> -> vector<16x128xf32>
    %121 = vector.broadcast %17 : vector<1x128xf32> to vector<16x128xf32>
    %122 = arith.addf %120, %121 : vector<16x128xf32>
    %c0_50 = arith.constant 0 : index
    %c0_51 = arith.constant 0 : index
    %c0_52 = arith.constant 0 : index
    %123 = vector.load %arg5[%c0_50, %c0_51, %c0_52] : memref<1x16x128xf32, #tpu.memory_space<vmem>>, vector<1x16x128xf32>
    %124 = vector.shape_cast %123 : vector<1x16x128xf32> to vector<16x128xf32>
    %125 = vector.shape_cast %122 : vector<16x128xf32> to vector<1x16x128xf32>
    tpu.vector_store %arg5[%c0_50, %c0_51, %c0_52], %125 {strides = array<i32>} : memref<1x16x128xf32, #tpu.memory_space<vmem>>, vector<1x16x128xf32>,
    return
  }
  func.func @transform_0(%arg0: i32) -> (i32, i32, i32) {
    %c0_i32 = arith.constant 0 : i32
    %c0_i32_0 = arith.constant 0 : i32
    %c0_i32_1 = arith.constant 0 : i32
    return %arg0, %c0_i32, %c0_i32_0 : i32, i32, i32
  }
  func.func @transform_1(%arg0: i32) -> (i32, i32, i32) {
    %c0_i32 = arith.constant 0 : i32
    %c0_i32_0 = arith.constant 0 : i32
    %c0_i32_1 = arith.constant 0 : i32
    return %arg0, %c0_i32, %c0_i32_0 : i32, i32, i32
  }
  func.func @transform_2(%arg0: i32) -> (i32, i32) {
    %c0_i32 = arith.constant 0 : i32
    %c0_i32_0 = arith.constant 0 : i32
    %c0_i32_1 = arith.constant 0 : i32
    return %c0_i32, %c0_i32_0 : i32, i32
  }
  func.func @transform_3(%arg0: i32) -> (i32, i32) {
    %c0_i32 = arith.constant 0 : i32
    %c0_i32_0 = arith.constant 0 : i32
    %c0_i32_1 = arith.constant 0 : i32
    return %c0_i32, %c0_i32_0 : i32, i32
  }
  func.func @transform_4(%arg0: i32) -> (i32, i32, i32) {
    %c0_i32 = arith.constant 0 : i32
    %c0_i32_0 = arith.constant 0 : i32
    %c0_i32_1 = arith.constant 0 : i32
    return %arg0, %c0_i32, %c0_i32_0 : i32, i32, i32
  }
}

</mosaic_0001>

<llo_original>
// kernel: custom_model_forward.1
$region0: #{custom_model_forward.1}
  #allocation0 [shape = 'u32[]', space=smem, size = 0x4, offset = 0x4, fixed_abs, tag = 'smem constant byte address 0x4 - core index']
  #allocation1 [shape = 'u32[144,128]{1,0:T(1,128)}', space=vmem, size = 0x12000, scoped, tag = 'internal scratch']
  %s0 = inlined_call_operand.hbm [shape: f32[4,16,16], index: 0, kind: input, shape index: {}]
  %s1 = inlined_call_operand.hbm [shape: f32[4,16,32], index: 1, kind: input, shape index: {}]
  %s2 = inlined_call_operand.hbm [shape: bf16[256,128], index: 2, kind: input, shape index: {}]
  %s3 = inlined_call_operand.hbm [shape: f32[16,128], index: 3, kind: input, shape index: {}]
  %s4 = inlined_call_operand.hbm [shape: f32[4,16,128], index: 4, kind: output, shape index: {}]
  %s5 = sld [smem:[#allocation0]]
  $region65: #{custom_model_forward.1} parent=0
    _
  %s7 = ssub.s32 1, %s5
  %s8 = scalar_select 0, %s7, %s5
  $region1: #{custom_model_forward.1} parent=0
    #allocation2 [shape = 'u8[16384]{0}', space=vmem, size = 0x4000, scoped, tag = 'input window, operand 0']
    #allocation3 [shape = 's32[2]{0}', space=sflag, size = 0x8, scoped, tag = 'scoped memory for custom_model_forward.1']
    #allocation4 [shape = 's32[2]{0}', space=sflag, size = 0x8, scoped, tag = 'scoped memory for custom_model_forward.1']
    #allocation5 [shape = 'u8[16384]{0}', space=vmem, size = 0x4000, scoped, tag = 'input window, operand 1']
    #allocation6 [shape = 's32[2]{0}', space=sflag, size = 0x8, scoped, tag = 'scoped memory for custom_model_forward.1']
    #allocation7 [shape = 'u8[65536]{0}', space=vmem, size = 0x10000, scoped, tag = 'input window, operand 2, single buffered']
    #allocation8 [shape = 'u8[8192]{0}', space=vmem, size = 0x2000, scoped, tag = 'input window, operand 3, single buffered']
    #allocation9 [shape = 's32[1]{0}', space=sflag, size = 0x4, scoped, tag = 'scoped memory for custom_model_forward.1']
    #allocation10 [shape = 'u8[16384]{0}', space=vmem, size = 0x4000, scoped, tag = 'output window, operand 0']
    %9 = vsyncpa [#allocation3], 0
    %s10 = scalar_lea.sflag [#allocation3], 1
    %11 = vsyncpa %s10, 0
    %12 = vsyncpa [#allocation6], 0
    %s13 = scalar_lea.sflag [#allocation6], 1
    %14 = vsyncpa %s13, 0
    %15 = vsyncpa [#allocation9], 0
    %16 = vsyncpa [#allocation4], 0
    %s17 = scalar_lea.sflag [#allocation4], 1
    %18 = vsyncpa %s17, 0
    loop: start=0, step=1, limit=6
    $region2: #{custom_model_forward.1} parent=1 // loop_pre_header
      _
    $region3: #{custom_model_forward.1} parent=1 // loop_header
      %s20 = sphi 0, %s24
      %p21 = scmp.ge.s32.totalorder %s20, 6
      %s30 = sphi 0, %s32
      %s33 = sphi 0, %s30
      %s34 = sphi 0, %s33
      %s50 = sphi 0, %s34
      %s56 = sphi 0, %s58
      %s59 = sphi 0, %s56
      %s60 = sphi 0, %s59
      %s76 = sphi 0, %s60
      %s80 = sphi 0, %s80
      %s82 = sphi 0, %s80
      %s83 = sphi 0, %s82
      %s97 = sphi 0, %s83
      %s101 = sphi 0, %s101
      %s103 = sphi 0, %s101
      %s104 = sphi 0, %s103
      %s118 = sphi 0, %s104
      %s124 = sphi 0, %s126
      %s127 = sphi 0, %s124
      %s128 = sphi 0, %s127
      %s144 = sphi 0, %s128
    $region4: #{custom_model_forward.1} parent=1 // loop_header_branch
      %23 = sbr.rel (%p21) target = $region8
    $region5: #{custom_model_forward.1} parent=1 // loop_body
      %s25 = ssub.s32 %s20, 1
      %s26 = ssub.s32 %s20, 2
      %s27 = sadd.s32 %s20, 1
      %s28 = ssub.s32 %s20, %s27
      %p29 = scmp.eq.s32.totalorder %s28, 0
      %s31 = sadd.s32 %s30, 1
      %s32 = scalar_select %p29, %s30, %s31
      %p35 = pneg %p29
      %p36 = scmp.eq.s32.totalorder %s20, 3
      %p37 = por %p35, %p36
      %p38 = scmp.ne.s32.totalorder %s30, %s33
      %p39 = scmp.eq.s32.totalorder %s20, 0
      %p40 = por %p38, %p39
      %p41 = scmp.ne.s32.totalorder %s30, %s33
      %p42 = scmp.eq.s32.totalorder %s25, 3
      %p43 = por %p41, %p42
      %p44 = scmp.ne.s32.totalorder %s33, %s34
      %p45 = scmp.eq.s32.totalorder %s25, 0
      %p46 = por %p44, %p45
      %p47 = scmp.ne.s32.totalorder %s33, %s34
      %p48 = scmp.eq.s32.totalorder %s26, 3
      %p49 = por %p47, %p48
      %p51 = scmp.ne.s32.totalorder %s34, %s50
      %p52 = scmp.eq.s32.totalorder %s26, 0
      %p53 = por %p51, %p52
      %s54 = ssub.s32 %s20, %s27
      %p55 = scmp.eq.s32.totalorder %s54, 0
      %s57 = sadd.s32 %s56, 1
      %s58 = scalar_select %p55, %s56, %s57
      %p61 = pneg %p55
      %p62 = scmp.eq.s32.totalorder %s20, 3
      %p63 = por %p61, %p62
      %p64 = scmp.ne.s32.totalorder %s56, %s59
      %p65 = scmp.eq.s32.totalorder %s20, 0
      %p66 = por %p64, %p65
      %p67 = scmp.ne.s32.totalorder %s56, %s59
      %p68 = scmp.eq.s32.totalorder %s25, 3
      %p69 = por %p67, %p68
      %p70 = scmp.ne.s32.totalorder %s59, %s60
      %p71 = scmp.eq.s32.totalorder %s25, 0
      %p72 = por %p70, %p71
      %p73 = scmp.ne.s32.totalorder %s59, %s60
      %p74 = scmp.eq.s32.totalorder %s26, 3
      %p75 = por %p73, %p74
      %p77 = scmp.ne.s32.totalorder %s60, %s76
      %p78 = scmp.eq.s32.totalorder %s26, 0
      %p79 = por %p77, %p78
      %s81 = sadd.s32 %s80, 1
      %p84 = scmp.eq.s32.totalorder %s20, 3
      %p85 = scmp.ne.s32.totalorder %s80, %s82
      %p86 = scmp.eq.s32.totalorder %s20, 0
      %p87 = por %p85, %p86
      %p88 = scmp.ne.s32.totalorder %s80, %s82
      %p89 = scmp.eq.s32.totalorder %s25, 3
      %p90 = por %p88, %p89
      %p91 = scmp.ne.s32.totalorder %s82, %s83
      %p92 = scmp.eq.s32.totalorder %s25, 0
      %p93 = por %p91, %p92
      %p94 = scmp.ne.s32.totalorder %s82, %s83
      %p95 = scmp.eq.s32.totalorder %s26, 3
      %p96 = por %p94, %p95
      %p98 = scmp.ne.s32.totalorder %s83, %s97
      %p99 = scmp.eq.s32.totalorder %s26, 0
      %p100 = por %p98, %p99
      %s102 = sadd.s32 %s101, 1
      %p105 = scmp.eq.s32.totalorder %s20, 3
      %p106 = scmp.ne.s32.totalorder %s101, %s103
      %p107 = scmp.eq.s32.totalorder %s20, 0
      %p108 = por %p106, %p107
      %p109 = scmp.ne.s32.totalorder %s101, %s103
      %p110 = scmp.eq.s32.totalorder %s25, 3
      %p111 = por %p109, %p110
      %p112 = scmp.ne.s32.totalorder %s103, %s104
      %p113 = scmp.eq.s32.totalorder %s25, 0
      %p114 = por %p112, %p113
      %p115 = scmp.ne.s32.totalorder %s103, %s104
      %p116 = scmp.eq.s32.totalorder %s26, 3
      %p117 = por %p115, %p116
      %p119 = scmp.ne.s32.totalorder %s104, %s118
      %p120 = scmp.eq.s32.totalorder %s26, 0
      %p121 = por %p119, %p120
      %s122 = ssub.s32 %s20, %s27
      %p123 = scmp.eq.s32.totalorder %s122, 0
      %s125 = sadd.s32 %s124, 1
      %s126 = scalar_select %p123, %s124, %s125
      %p129 = pneg %p123
      %p130 = scmp.eq.s32.totalorder %s20, 3
      %p131 = por %p129, %p130
      %p132 = scmp.ne.s32.totalorder %s124, %s127
      %p133 = scmp.eq.s32.totalorder %s20, 0
      %p134 = por %p132, %p133
      %p135 = scmp.ne.s32.totalorder %s124, %s127
      %p136 = scmp.eq.s32.totalorder %s25, 3
      %p137 = por %p135, %p136
      %p138 = scmp.ne.s32.totalorder %s127, %s128
      %p139 = scmp.eq.s32.totalorder %s25, 0
      %p140 = por %p138, %p139
      %p141 = scmp.ne.s32.totalorder %s127, %s128
      %p142 = scmp.eq.s32.totalorder %s26, 3
      %p143 = por %p141, %p142
      %p145 = scmp.ne.s32.totalorder %s128, %s144
      %p146 = scmp.eq.s32.totalorder %s26, 0
      %p147 = por %p145, %p146
      %p148 = scmp.le.s32.totalorder 1, %s20
      %p149 = scmp.lt.s32.totalorder %s20, 5
      %p150 = pnand %p148, %p149
      %p151 = pneg %p150
      // Predicated region
      $region9: #{custom_model_forward.1} parent=5 // pred_check
        _
      $region10: #{custom_model_forward.1} parent=5 // pred_check_branch
        %153 = sbr.rel (%p150) target = $region12
      $region11: #{custom_model_forward.1} parent=5 // pred_region
        %s154 = ssub.s32 %s20, 1
        // Predicated region
        $region13: #{custom_model_forward.1} parent=11 // pred_check
          %p155 = pneg %p93
        $region14: #{custom_model_forward.1} parent=11 // pred_check_branch
          %157 = sbr.rel (%p155) target = $region16
        $region15: #{custom_model_forward.1} parent=11 // pred_region
          %s159 = ssub.s32 2048, 2048
          %160 = vsyncadd [#allocation6], %s159
          %s161 = sshll.u32 [#allocation7], 4
          %s162 = int_to_ptr.vmem [resolvable:$true] %s161
          %167 = dma.hbm_to_vmem [thread:$0]  %s2, 2048, %s162, [#allocation6], 64, 64, 4
        $region16: #{custom_model_forward.1} parent=11 // pred_fallthru
          _
        // Predicated region
        $region17: #{custom_model_forward.1} parent=11 // pred_check
          %p168 = pneg %p114
        $region18: #{custom_model_forward.1} parent=11 // pred_check_branch
          %170 = sbr.rel (%p168) target = $region20
        $region19: #{custom_model_forward.1} parent=11 // pred_region
          %s172 = ssub.s32 256, 256
          %173 = vsyncadd [#allocation9], %s172
          %s174 = sshll.u32 [#allocation8], 4
          %s175 = int_to_ptr.vmem [resolvable:$true] %s174
          %180 = dma.hbm_to_vmem [thread:$0]  %s3, 256, %s175, [#allocation9], 128, 128, 8
        $region20: #{custom_model_forward.1} parent=11 // pred_fallthru
          _
      $region12: #{custom_model_forward.1} parent=5 // pred_fallthru
        _
      %p181 = scmp.lt.s32.totalorder %s20, 4
      // Predicated region
      $region21: #{custom_model_forward.1} parent=5 // pred_check
        %p182 = pneg %p181
      $region22: #{custom_model_forward.1} parent=5 // pred_check_branch
        %184 = sbr.rel (%p182) target = $region24
      $region23: #{custom_model_forward.1} parent=5 // pred_region
        // Predicated region
        $region25: #{custom_model_forward.1} parent=23 // pred_check
          %p185 = pneg %p40
        $region26: #{custom_model_forward.1} parent=23 // pred_check_branch
          %187 = sbr.rel (%p185) target = $region28
        $region27: #{custom_model_forward.1} parent=23 // pred_region
          %s188 = sand.u32 %s30, 1
          %s189 = scalar_lea.sflag [#allocation3], %s188
          %s190 = sand.u32 %s30, 1
          %s191 = smul.addr %s190, 16
          %s192 = scalar_lea.vmem [#allocation2], %s191
          %s194 = ssub.s32 256, 256
          %195 = vsyncadd %s189, %s194
          %s196 = smul.addr %s20, 2
          %s197 = smul.addr %s196, 128
          %s198 = scalar_lea.hbm %s0, %s197
          %s199 = sshll.u32 %s192, 4
          %s200 = int_to_ptr.vmem [resolvable:$true] %s199
          %205 = dma.hbm_to_vmem [thread:$0]  %s198, 256, %s200, %s189, 128, 128, 8
        $region28: #{custom_model_forward.1} parent=23 // pred_fallthru
          _
        // Predicated region
        $region29: #{custom_model_forward.1} parent=23 // pred_check
          %p206 = pneg %p66
        $region30: #{custom_model_forward.1} parent=23 // pred_check_branch
          %208 = sbr.rel (%p206) target = $region32
        $region31: #{custom_model_forward.1} parent=23 // pred_region
          %s209 = sand.u32 %s20, 1
          %s210 = scalar_lea.sflag [#allocation6], %s209
          %s211 = sand.u32 %s56, 1
          %s212 = smul.addr %s211, 16
          %s213 = scalar_lea.vmem [#allocation5], %s212
          %s215 = ssub.s32 256, 256
          %216 = vsyncadd %s210, %s215
          %s217 = smul.addr %s20, 2
          %s218 = smul.addr %s217, 128
          %s219 = scalar_lea.hbm %s1, %s218
          %s220 = sshll.u32 %s213, 4
          %s221 = int_to_ptr.vmem [resolvable:$true] %s220
          %226 = dma.hbm_to_vmem [thread:$0]  %s219, 256, %s221, %s210, 128, 128, 8
        $region32: #{custom_model_forward.1} parent=23 // pred_fallthru
          _
      $region24: #{custom_model_forward.1} parent=5 // pred_fallthru
        _
      %p227 = scmp.le.s32.totalorder 1, %s20
      %p228 = scmp.lt.s32.totalorder %s20, 5
      %p229 = pnand %p227, %p228
      %p230 = pneg %p229
      // Predicated region
      $region33: #{custom_model_forward.1} parent=5 // pred_check
        _
      $region34: #{custom_model_forward.1} parent=5 // pred_check_branch
        %232 = sbr.rel (%p229) target = $region36
      $region35: #{custom_model_forward.1} parent=5 // pred_region
        %s233 = ssub.s32 %s20, 1
        %s234 = sand.u32 %s33, 1
        %s235 = scalar_lea.sflag [#allocation3], %s234
        %s236 = sand.u32 %s33, 1
        %s237 = smul.addr %s236, 16
        %s238 = scalar_lea.vmem [#allocation2], %s237
        // Predicated region
        $region37: #{custom_model_forward.1} parent=35 // pred_check
          %p239 = pneg %p46
        $region38: #{custom_model_forward.1} parent=35 // pred_check_branch
          %241 = sbr.rel (%p239) target = $region40
        $region39: #{custom_model_forward.1} parent=35 // pred_region
          %242 = dma.done %s235, 256
        $region40: #{custom_model_forward.1} parent=35 // pred_fallthru
          _
        %s243 = sand.u32 %s25, 1
        %s244 = scalar_lea.sflag [#allocation6], %s243
        %s245 = sand.u32 %s59, 1
        %s246 = smul.addr %s245, 16
        %s247 = scalar_lea.vmem [#allocation5], %s246
        // Predicated region
        $region41: #{custom_model_forward.1} parent=35 // pred_check
          %p248 = pneg %p72
        $region42: #{custom_model_forward.1} parent=35 // pred_check_branch
          %250 = sbr.rel (%p248) target = $region44
        $region43: #{custom_model_forward.1} parent=35 // pred_region
          %251 = dma.done %s244, 256
        $region44: #{custom_model_forward.1} parent=35 // pred_fallthru
          _
        // Predicated region
        $region45: #{custom_model_forward.1} parent=35 // pred_check
          %p252 = pneg %p93
        $region46: #{custom_model_forward.1} parent=35 // pred_check_branch
          %254 = sbr.rel (%p252) target = $region48
        $region47: #{custom_model_forward.1} parent=35 // pred_region
          %255 = dma.done [#allocation6], 2048
        $region48: #{custom_model_forward.1} parent=35 // pred_fallthru
          _
        // Predicated region
        $region49: #{custom_model_forward.1} parent=35 // pred_check
          %p256 = pneg %p114
        $region50: #{custom_model_forward.1} parent=35 // pred_check_branch
          %258 = sbr.rel (%p256) target = $region52
        $region51: #{custom_model_forward.1} parent=35 // pred_region
          %259 = dma.done [#allocation9], 256
        $region52: #{custom_model_forward.1} parent=35 // pred_fallthru
          _
        %s260 = sand.u32 %s33, 1
        %s261 = scalar_lea.sflag [#allocation3], %s260
        %s262 = sand.u32 %s33, 1
        %s263 = smul.addr %s262, 16
        %s264 = scalar_lea.vmem [#allocation2], %s263
        %p265 = pneg %p46
        %p266 = pneg %p43
        %s267 = sand.u32 %s25, 1
        %s268 = scalar_lea.sflag [#allocation6], %s267
        %s269 = sand.u32 %s59, 1
        %s270 = smul.addr %s269, 16
        %s271 = scalar_lea.vmem [#allocation5], %s270
        %p272 = pneg %p72
        %p273 = pneg %p69
        %p274 = pneg %p93
        %p275 = pneg %p90
        %p276 = pneg %p114
        %p277 = pneg %p111
        %p278 = pneg %p140
        %p279 = pneg %p137
        %s280 = sand.u32 %s127, 1
        %s281 = scalar_lea.sflag [#allocation4], %s280
        %s282 = sand.u32 %s127, 1
        %s283 = smul.addr %s282, 16
        %s284 = scalar_lea.vmem [#allocation10], %s283
        %v286 = vld [vmem:[%s238] sm:$0xff]
        %v287 = vld [vmem:[%s238 + $0x8] sm:$0xff]
        %v288 = vld [vmem:[%s247] sm:$0xff]
        %v289 = vld [vmem:[%s247 + $0x8] sm:$0xff]
        %v290 = vld [vmem:[#allocation7] sm:$0xf]
        %v291 = vld [vmem:[#allocation7 + $0x4] sm:$0xf]
        %v292 = vld [vmem:[#allocation7 + $0x8] sm:$0xf]
        %v293 = vld [vmem:[#allocation7 + $0xc] sm:$0xf]
        %v294 = vld [vmem:[#allocation7 + $0x10] sm:$0xf]
        %v295 = vld [vmem:[#allocation7 + $0x14] sm:$0xf]
        %v296 = vld [vmem:[#allocation7 + $0x18] sm:$0xf]
        %v297 = vld [vmem:[#allocation7 + $0x1c] sm:$0xf]
        %v298 = vld [vmem:[#allocation7 + $0x20] sm:$0xf]
        %v299 = vld [vmem:[#allocation7 + $0x24] sm:$0xf]
        %v300 = vld [vmem:[#allocation7 + $0x28] sm:$0xf]
        %v301 = vld [vmem:[#allocation7 + $0x2c] sm:$0xf]
        %v302 = vld [vmem:[#allocation7 + $0x30] sm:$0xf]
        %v303 = vld [vmem:[#allocation7 + $0x34] sm:$0xf]
        %v304 = vld [vmem:[#allocation7 + $0x38] sm:$0xf]
        %v305 = vld [vmem:[#allocation7 + $0x3c] sm:$0xf]
        %v306 = vld [vmem:[#allocation7 + $0x40] sm:$0xf]
        %v307 = vld [vmem:[#allocation7 + $0x44] sm:$0xf]
        %v308 = vld [vmem:[#allocation7 + $0x48] sm:$0xf]
        %v309 = vld [vmem:[#allocation7 + $0x4c] sm:$0xf]
        %v310 = vld [vmem:[#allocation7 + $0x50] sm:$0xf]
        %v311 = vld [vmem:[#allocation7 + $0x54] sm:$0xf]
        %v312 = vld [vmem:[#allocation7 + $0x58] sm:$0xf]
        %v313 = vld [vmem:[#allocation7 + $0x5c] sm:$0xf]
        %v314 = vld [vmem:[#allocation7 + $0x60] sm:$0xf]
        %v315 = vld [vmem:[#allocation7 + $0x64] sm:$0xf]
        %v316 = vld [vmem:[#allocation7 + $0x68] sm:$0xf]
        %v317 = vld [vmem:[#allocation7 + $0x6c] sm:$0xf]
        %v318 = vld [vmem:[#allocation7 + $0x70] sm:$0xf]
        %v319 = vld [vmem:[#allocation7 + $0x74] sm:$0xf]
        %v320 = vld [vmem:[#allocation7 + $0x78] sm:$0xf]
        %v321 = vld [vmem:[#allocation7 + $0x7c] sm:$0xf]
        %v322 = vld [vmem:[#allocation8] sm:$0x1]
        %v323 = vld [vmem:[#allocation8 + $0x1] sm:$0x1]
        %v324 = vld [vmem:[#allocation8 + $0x2] sm:$0x1]
        %v325 = vld [vmem:[#allocation8 + $0x3] sm:$0x1]
        %v326 = vld [vmem:[#allocation8 + $0x4] sm:$0x1]
        %v327 = vld [vmem:[#allocation8 + $0x5] sm:$0x1]
        %v328 = vld [vmem:[#allocation8 + $0x6] sm:$0x1]
        %v329 = vld [vmem:[#allocation8 + $0x7] sm:$0x1]
        %v330 = vld [vmem:[#allocation8 + $0x8] sm:$0x1]
        %v331 = vld [vmem:[#allocation8 + $0x9] sm:$0x1]
        %v332 = vld [vmem:[#allocation8 + $0xa] sm:$0x1]
        %v333 = vpack.c.bf16 %v289, %v288
        %v338 = vunpack.c.l.b16 %v290
        %v339 = vunpack.c.l.b16 %v291
        %v340 = vunpack.c.l.b16 %v292
        %v341 = vunpack.c.l.b16 %v293
        %v342 = vpack.c.b16 %v339, %v338
        %v343 = vpack.c.b16 %v341, %v340
        %vm346 = vcmask 261120
        %v348 = vsel %vm346, %v333, 0
        %350 = vmatprep.subr.bf16.mxu0 0
        %351 = vmatpush1.bf16.msra.mxu0 %v342
        %352 = vmatprep.subr.bf16.mxu0 0
        %353 = vmatpush1.bf16.msra.mxu0 %v343
        %354 = vmatprep.subr.bf16.mxu0 0
        %355 = vmatpush1.bf16.msra.mxu0 0
        %356 = vmatprep.subr.bf16.mxu0 0
        %357 = vmatpush1.bf16.msra.mxu0 0
        %358 = vmatprep.subr.bf16.mxu0 0
        %359 = vmatpush1.bf16.msra.mxu0 0
        %360 = vmatprep.subr.bf16.mxu0 0
        %361 = vmatpush1.bf16.msra.mxu0 0
        %362 = vmatprep.subr.bf16.mxu0 0
        %363 = vmatpush1.bf16.msra.mxu0 0
        %364 = vmatprep.subr.bf16.mxu0 0
        %365 = vmatpush1.bf16.msra.mxu0 0
        %366 = vmatprep.subr.bf16.mxu0 0
        %367 = vmatpush1.bf16.msra.mxu0 0
        %368 = vmatprep.subr.bf16.mxu0 0
        %369 = vmatpush1.bf16.msra.mxu0 0
        %370 = vmatprep.subr.bf16.mxu0 0
        %371 = vmatpush1.bf16.msra.mxu0 0
        %372 = vmatprep.subr.bf16.mxu0 0
        %373 = vmatpush1.bf16.msra.mxu0 0
        %374 = vmatprep.subr.bf16.mxu0 0
        %375 = vmatpush1.bf16.msra.mxu0 0
        %376 = vmatprep.subr.bf16.mxu0 0
        %377 = vmatpush1.bf16.msra.mxu0 0
        %378 = vmatprep.subr.bf16.mxu0 0
        %379 = vmatpush1.bf16.msra.mxu0 0
        %380 = vmatprep.subr.bf16.mxu0 0
        %381 = vmatpush1.bf16.msra.mxu0 0
        %382 = vmatprep.mubr.bf16.mxu0 0
        %383 = vmatmul.mubr.bf16.gmra.mrb[0].mxu0 %v348
        %v384 = vpop.f32.mrb[0].mxu0
        %v385 = vadd.f32 0.0, %v384
        %v386 = vpop.f32.mrb[0].mxu0
        %v387 = vpop.f32.mrb[0].mxu0
        %v388 = vadd.f32 0.0, %v387
        %v389 = vpop.f32.mrb[0].mxu0
        %390 = vdwg.mxu0
        %v391 = vpack.c.bf16 %v287, %v286
        %v392 = vpack.c.bf16 %v388, %v385
        %v393 = vlaneseq
        %v394 = vshrl.u32 %v393, 7
        %v395 = vsub.s32 0, %v394
        %v396 = vrot.slane %v322, %v395
        %vm397 = vcmask 130048
        %v399 = vsel %vm397, %v391, 0
        %401 = vmatprep.subr.bf16.mxu0 0
        %402 = vmatpush1.bf16.msra.mxu0 %v392
        %403 = vmatprep.subr.bf16.mxu0 0
        %404 = vmatpush1.bf16.msra.mxu0 0
        %405 = vmatprep.subr.bf16.mxu0 0
        %406 = vmatpush1.bf16.msra.mxu0 0
        %407 = vmatprep.subr.bf16.mxu0 0
        %408 = vmatpush1.bf16.msra.mxu0 0
        %409 = vmatprep.subr.bf16.mxu0 0
        %410 = vmatpush1.bf16.msra.mxu0 0
        %411 = vmatprep.subr.bf16.mxu0 0
        %412 = vmatpush1.bf16.msra.mxu0 0
        %413 = vmatprep.subr.bf16.mxu0 0
        %414 = vmatpush1.bf16.msra.mxu0 0
        %415 = vmatprep.subr.bf16.mxu0 0
        %416 = vmatpush1.bf16.msra.mxu0 0
        %417 = vmatprep.subr.bf16.mxu0 0
        %418 = vmatpush1.bf16.msra.mxu0 0
        %419 = vmatprep.subr.bf16.mxu0 0
        %420 = vmatpush1.bf16.msra.mxu0 0
        %421 = vmatprep.subr.bf16.mxu0 0
        %422 = vmatpush1.bf16.msra.mxu0 0
        %423 = vmatprep.subr.bf16.mxu0 0
        %424 = vmatpush1.bf16.msra.mxu0 0
        %425 = vmatprep.subr.bf16.mxu0 0
        %426 = vmatpush1.bf16.msra.mxu0 0
        %427 = vmatprep.subr.bf16.mxu0 0
        %428 = vmatpush1.bf16.msra.mxu0 0
        %429 = vmatprep.subr.bf16.mxu0 0
        %430 = vmatpush1.bf16.msra.mxu0 0
        %431 = vmatprep.subr.bf16.mxu0 0
        %432 = vmatpush1.bf16.msra.mxu0 0
        %433 = vmatprep.mubr.bf16.mxu0 0
        %434 = vmatmul.mubr.bf16.gmra.mrb[0].mxu0 %v399
        %v435 = vpop.f32.mrb[0].mxu0
        %v436 = vadd.f32 %v396, %v435
        %v437 = vpop.f32.mrb[0].mxu0
        %v438 = vpop.f32.mrb[0].mxu0
        %v439 = vadd.f32 %v396, %v438
        %v440 = vpop.f32.mrb[0].mxu0
        %441 = vdwg.mxu0
        %v442 = vmax.f32 %v436, 0.0
        %v443 = vmax.f32 %v439, 0.0
        %v444 = vpack.c.bf16 %v443, %v442
        %v449 = vunpack.c.l.b16 %v294
        %v450 = vunpack.c.l.b16 %v295
        %v451 = vunpack.c.l.b16 %v296
        %v452 = vunpack.c.l.b16 %v297
        %v453 = vpack.c.b16 %v450, %v449
        %v454 = vpack.c.b16 %v452, %v451
        %v458 = vsel %vm346, %v444, 0
        %460 = vmatprep.subr.bf16.mxu0 0
        %461 = vmatpush1.bf16.msra.mxu0 %v453
        %462 = vmatprep.subr.bf16.mxu0 0
        %463 = vmatpush1.bf16.msra.mxu0 %v454
        %464 = vmatprep.subr.bf16.mxu0 0
        %465 = vmatpush1.bf16.msra.mxu0 0
        %466 = vmatprep.subr.bf16.mxu0 0
        %467 = vmatpush1.bf16.msra.mxu0 0
        %468 = vmatprep.subr.bf16.mxu0 0
        %469 = vmatpush1.bf16.msra.mxu0 0
        %470 = vmatprep.subr.bf16.mxu0 0
        %471 = vmatpush1.bf16.msra.mxu0 0
        %472 = vmatprep.subr.bf16.mxu0 0
        %473 = vmatpush1.bf16.msra.mxu0 0
        %474 = vmatprep.subr.bf16.mxu0 0
        %475 = vmatpush1.bf16.msra.mxu0 0
        %476 = vmatprep.subr.bf16.mxu0 0
        %477 = vmatpush1.bf16.msra.mxu0 0
        %478 = vmatprep.subr.bf16.mxu0 0
        %479 = vmatpush1.bf16.msra.mxu0 0
        %480 = vmatprep.subr.bf16.mxu0 0
        %481 = vmatpush1.bf16.msra.mxu0 0
        %482 = vmatprep.subr.bf16.mxu0 0
        %483 = vmatpush1.bf16.msra.mxu0 0
        %484 = vmatprep.subr.bf16.mxu0 0
        %485 = vmatpush1.bf16.msra.mxu0 0
        %486 = vmatprep.subr.bf16.mxu0 0
        %487 = vmatpush1.bf16.msra.mxu0 0
        %488 = vmatprep.subr.bf16.mxu0 0
        %489 = vmatpush1.bf16.msra.mxu0 0
        %490 = vmatprep.subr.bf16.mxu0 0
        %491 = vmatpush1.bf16.msra.mxu0 0
        %492 = vmatprep.mubr.bf16.mxu0 0
        %493 = vmatmul.mubr.bf16.gmra.mrb[0].mxu0 %v458
        %v494 = vpop.f32.mrb[0].mxu0
        %v495 = vadd.f32 0.0, %v494
        %v496 = vpop.f32.mrb[0].mxu0
        %v497 = vpop.f32.mrb[0].mxu0
        %v498 = vadd.f32 0.0, %v497
        %v499 = vpop.f32.mrb[0].mxu0
        %500 = vdwg.mxu0
        %v501 = vpack.c.bf16 %v498, %v495
        %v502 = vlaneseq
        %v503 = vshrl.u32 %v502, 7
        %v504 = vsub.s32 0, %v503
        %v505 = vrot.slane %v323, %v504
        %506 = vmatprep.subr.bf16.mxu0 0
        %507 = vmatpush1.bf16.msra.mxu0 %v501
        %508 = vmatprep.subr.bf16.mxu0 0
        %509 = vmatpush1.bf16.msra.mxu0 0
        %510 = vmatprep.subr.bf16.mxu0 0
        %511 = vmatpush1.bf16.msra.mxu0 0
        %512 = vmatprep.subr.bf16.mxu0 0
        %513 = vmatpush1.bf16.msra.mxu0 0
        %514 = vmatprep.subr.bf16.mxu0 0
        %515 = vmatpush1.bf16.msra.mxu0 0
        %516 = vmatprep.subr.bf16.mxu0 0
        %517 = vmatpush1.bf16.msra.mxu0 0
        %518 = vmatprep.subr.bf16.mxu0 0
        %519 = vmatpush1.bf16.msra.mxu0 0
        %520 = vmatprep.subr.bf16.mxu0 0
        %521 = vmatpush1.bf16.msra.mxu0 0
        %522 = vmatprep.subr.bf16.mxu0 0
        %523 = vmatpush1.bf16.msra.mxu0 0
        %524 = vmatprep.subr.bf16.mxu0 0
        %525 = vmatpush1.bf16.msra.mxu0 0
        %526 = vmatprep.subr.bf16.mxu0 0
        %527 = vmatpush1.bf16.msra.mxu0 0
        %528 = vmatprep.subr.bf16.mxu0 0
        %529 = vmatpush1.bf16.msra.mxu0 0
        %530 = vmatprep.subr.bf16.mxu0 0
        %531 = vmatpush1.bf16.msra.mxu0 0
        %532 = vmatprep.subr.bf16.mxu0 0
        %533 = vmatpush1.bf16.msra.mxu0 0
        %534 = vmatprep.subr.bf16.mxu0 0
        %535 = vmatpush1.bf16.msra.mxu0 0
        %536 = vmatprep.subr.bf16.mxu0 0
        %537 = vmatpush1.bf16.msra.mxu0 0
        %538 = vmatprep.mubr.bf16.mxu0 0
        %539 = vmatmul.mubr.bf16.gmra.mrb[0].mxu0 %v399
        %v540 = vpop.f32.mrb[0].mxu0
        %v541 = vadd.f32 %v505, %v540
        %v542 = vpop.f32.mrb[0].mxu0
        %v543 = vpop.f32.mrb[0].mxu0
        %v544 = vadd.f32 %v505, %v543
        %v545 = vpop.f32.mrb[0].mxu0
        %546 = vdwg.mxu0
        %v547 = vpack.c.bf16 %v544, %v541
        %v548 = vlaneseq
        %v549 = vshrl.u32 %v548, 7
        %v550 = vsub.s32 0, %v549
        %v551 = vrot.slane %v324, %v550
        %v556 = vunpack.c.l.b16 %v298
        %v557 = vunpack.c.l.b16 %v299
        %v558 = vunpack.c.l.b16 %v300
        %v559 = vunpack.c.l.b16 %v301
        %v560 = vpack.c.b16 %v557, %v556
        %v561 = vpack.c.b16 %v559, %v558
        %v565 = vsel %vm346, %v547, 0
        %567 = vmatprep.subr.bf16.mxu0 0
        %568 = vmatpush1.bf16.msra.mxu0 %v560
        %569 = vmatprep.subr.bf16.mxu0 0
        %570 = vmatpush1.bf16.msra.mxu0 %v561
        %571 = vmatprep.subr.bf16.mxu0 0
        %572 = vmatpush1.bf16.msra.mxu0 0
        %573 = vmatprep.subr.bf16.mxu0 0
        %574 = vmatpush1.bf16.msra.mxu0 0
        %575 = vmatprep.subr.bf16.mxu0 0
        %576 = vmatpush1.bf16.msra.mxu0 0
        %577 = vmatprep.subr.bf16.mxu0 0
        %578 = vmatpush1.bf16.msra.mxu0 0
        %579 = vmatprep.subr.bf16.mxu0 0
        %580 = vmatpush1.bf16.msra.mxu0 0
        %581 = vmatprep.subr.bf16.mxu0 0
        %582 = vmatpush1.bf16.msra.mxu0 0
        %583 = vmatprep.subr.bf16.mxu0 0
        %584 = vmatpush1.bf16.msra.mxu0 0
        %585 = vmatprep.subr.bf16.mxu0 0
        %586 = vmatpush1.bf16.msra.mxu0 0
        %587 = vmatprep.subr.bf16.mxu0 0
        %588 = vmatpush1.bf16.msra.mxu0 0
        %589 = vmatprep.subr.bf16.mxu0 0
        %590 = vmatpush1.bf16.msra.mxu0 0
        %591 = vmatprep.subr.bf16.mxu0 0
        %592 = vmatpush1.bf16.msra.mxu0 0
        %593 = vmatprep.subr.bf16.mxu0 0
        %594 = vmatpush1.bf16.msra.mxu0 0
        %595 = vmatprep.subr.bf16.mxu0 0
        %596 = vmatpush1.bf16.msra.mxu0 0
        %597 = vmatprep.subr.bf16.mxu0 0
        %598 = vmatpush1.bf16.msra.mxu0 0
        %599 = vmatprep.mubr.bf16.mxu0 0
        %600 = vmatmul.mubr.bf16.gmra.mrb[0].mxu0 %v565
        %v601 = vpop.f32.mrb[0].mxu0
        %v602 = vadd.f32 %v551, %v601
        %v603 = vpop.f32.mrb[0].mxu0
        %v604 = vpop.f32.mrb[0].mxu0
        %v605 = vadd.f32 %v551, %v604
        %v606 = vpop.f32.mrb[0].mxu0
        %607 = vdwg.mxu0
        %v608 = vpack.c.bf16 %v605, %v602
        %610 = vrot.lane.b32.xlu0 %v608, 96
        %v611 = vpop.permute.xlu0 %610
        %v613 = vsel %vm346, %v608, 0
        %v616 = vsel %vm346, %v611, 0
        %618 = vmatprep.subr.bf16.mxu0 0
        %619 = vmatpush1.bf16.xpose.msra.mxu0 %v616
        %620 = vmatprep.subr.bf16.mxu0 0
        %621 = vmatpush1.bf16.xpose.msra.mxu0 0
        %622 = vmatprep.subr.bf16.mxu0 0
        %623 = vmatpush1.bf16.xpose.msra.mxu0 0
        %624 = vmatprep.subr.bf16.mxu0 0
        %625 = vmatpush1.bf16.xpose.msra.mxu0 0
        %626 = vmatprep.subr.bf16.mxu0 0
        %627 = vmatpush1.bf16.xpose.msra.mxu0 0
        %628 = vmatprep.subr.bf16.mxu0 0
        %629 = vmatpush1.bf16.xpose.msra.mxu0 0
        %630 = vmatprep.subr.bf16.mxu0 0
        %631 = vmatpush1.bf16.xpose.msra.mxu0 0
        %632 = vmatprep.subr.bf16.mxu0 0
        %633 = vmatpush1.bf16.xpose.msra.mxu0 0
        %634 = vmatprep.subr.bf16.mxu0 0
        %635 = vmatpush1.bf16.xpose.msra.mxu0 0
        %636 = vmatprep.subr.bf16.mxu0 0
        %637 = vmatpush1.bf16.xpose.msra.mxu0 0
        %638 = vmatprep.subr.bf16.mxu0 0
        %639 = vmatpush1.bf16.xpose.msra.mxu0 0
        %640 = vmatprep.subr.bf16.mxu0 0
        %641 = vmatpush1.bf16.xpose.msra.mxu0 0
        %642 = vmatprep.subr.bf16.mxu0 0
        %643 = vmatpush1.bf16.xpose.msra.mxu0 0
        %644 = vmatprep.subr.bf16.mxu0 0
        %645 = vmatpush1.bf16.xpose.msra.mxu0 0
        %646 = vmatprep.subr.bf16.mxu0 0
        %647 = vmatpush1.bf16.xpose.msra.mxu0 0
        %648 = vmatprep.subr.bf16.mxu0 0
        %649 = vmatpush1.bf16.xpose.msra.mxu0 0
        %650 = vmatprep.mubr.bf16.mxu0 0
        %651 = vmatmul.mubr.bf16.gmra.mrb[0].mxu0 %v613
        %v652 = vpop.f32.mrb[0].mxu0
        %v653 = vadd.f32 0.0, %v652
        %v654 = vpop.f32.mrb[0].mxu0
        %v655 = vpop.f32.mrb[0].mxu0
        %v656 = vadd.f32 0.0, %v655
        %v657 = vpop.f32.mrb[0].mxu0
        %658 = vdwg.mxu0
        %v659 = vmul.f32 %v653, 0.17677669
        %v660 = vmul.f32 %v656, 0.17677669
        %v661 = vsel %vm397, %v659, -inf
        %662 = vmax.xlane.f32.xlu0 %v661
        %v663 = vpop.xlane.xlu0 %662
        %v664 = vsel %vm397, %v660, -inf
        %665 = vmax.xlane.f32.xlu0 %v664
        %v666 = vpop.xlane.xlu0 %665
        %v667 = vsub.f32 %v659, %v663
        %v668 = vsub.f32 %v660, %v666
        %v669 = vmul.f32 %v667, 1.442695
        %v670 = vpow.pop %v669
        %v671 = vmul.f32 %v668, 1.442695
        %v672 = vpow.pop %v671
        %v673 = vsel %vm397, %v670, 0.0
        %674 = vadd.xlane.f32.xlu0 %v673
        %v675 = vpop.xlane.xlu0 %674
        %v676 = vsel %vm397, %v672, 0.0
        %677 = vadd.xlane.f32.xlu0 %v676
        %v678 = vpop.xlane.xlu0 %677
        %v679 = vrcp.pop %v675
        %v680 = vrcp.pop %v678
        %v681 = vmul.f32 %v670, %v679
        %v682 = vmul.f32 %v672, %v680
        %v683 = vpack.c.bf16 %v682, %v681
        %684 = vrot.lane.b32.xlu0 %v608, 64
        %v685 = vpop.permute.xlu0 %684
        %v688 = vsel %vm397, %v683, 0
        %690 = vmatprep.subr.bf16.mxu0 0
        %691 = vmatpush1.bf16.msra.mxu0 %v685
        %692 = vmatprep.subr.bf16.mxu0 0
        %693 = vmatpush1.bf16.msra.mxu0 0
        %694 = vmatprep.subr.bf16.mxu0 0
        %695 = vmatpush1.bf16.msra.mxu0 0
        %696 = vmatprep.subr.bf16.mxu0 0
        %697 = vmatpush1.bf16.msra.mxu0 0
        %698 = vmatprep.subr.bf16.mxu0 0
        %699 = vmatpush1.bf16.msra.mxu0 0
        %700 = vmatprep.subr.bf16.mxu0 0
        %701 = vmatpush1.bf16.msra.mxu0 0
        %702 = vmatprep.subr.bf16.mxu0 0
        %703 = vmatpush1.bf16.msra.mxu0 0
        %704 = vmatprep.subr.bf16.mxu0 0
        %705 = vmatpush1.bf16.msra.mxu0 0
        %706 = vmatprep.subr.bf16.mxu0 0
        %707 = vmatpush1.bf16.msra.mxu0 0
        %708 = vmatprep.subr.bf16.mxu0 0
        %709 = vmatpush1.bf16.msra.mxu0 0
        %710 = vmatprep.subr.bf16.mxu0 0
        %711 = vmatpush1.bf16.msra.mxu0 0
        %712 = vmatprep.subr.bf16.mxu0 0
        %713 = vmatpush1.bf16.msra.mxu0 0
        %714 = vmatprep.subr.bf16.mxu0 0
        %715 = vmatpush1.bf16.msra.mxu0 0
        %716 = vmatprep.subr.bf16.mxu0 0
        %717 = vmatpush1.bf16.msra.mxu0 0
        %718 = vmatprep.subr.bf16.mxu0 0
        %719 = vmatpush1.bf16.msra.mxu0 0
        %720 = vmatprep.subr.bf16.mxu0 0
        %721 = vmatpush1.bf16.msra.mxu0 0
        %722 = vmatprep.mubr.bf16.mxu0 0
        %723 = vmatmul.mubr.bf16.gmra.mrb[0].mxu0 %v688
        %v724 = vpop.f32.mrb[0].mxu0
        %v725 = vadd.f32 0.0, %v724
        %v726 = vpop.f32.mrb[0].mxu0
        %v727 = vpop.f32.mrb[0].mxu0
        %v728 = vadd.f32 0.0, %v727
        %v729 = vpop.f32.mrb[0].mxu0
        %730 = vdwg.mxu0
        %v731 = vpack.c.bf16 %v728, %v725
        %v732 = vlaneseq
        %v733 = vshrl.u32 %v732, 7
        %v734 = vsub.s32 0, %v733
        %v735 = vrot.slane %v325, %v734
        %v740 = vunpack.c.l.b16 %v302
        %v741 = vunpack.c.l.b16 %v303
        %v742 = vunpack.c.l.b16 %v304
        %v743 = vunpack.c.l.b16 %v305
        %v744 = vpack.c.b16 %v741, %v740
        %v745 = vpack.c.b16 %v743, %v742
        %v749 = vsel %vm346, %v731, 0
        %751 = vmatprep.subr.bf16.mxu0 0
        %752 = vmatpush1.bf16.msra.mxu0 %v744
        %753 = vmatprep.subr.bf16.mxu0 0
        %754 = vmatpush1.bf16.msra.mxu0 %v745
        %755 = vmatprep.subr.bf16.mxu0 0
        %756 = vmatpush1.bf16.msra.mxu0 0
        %757 = vmatprep.subr.bf16.mxu0 0
        %758 = vmatpush1.bf16.msra.mxu0 0
        %759 = vmatprep.subr.bf16.mxu0 0
        %760 = vmatpush1.bf16.msra.mxu0 0
        %761 = vmatprep.subr.bf16.mxu0 0
        %762 = vmatpush1.bf16.msra.mxu0 0
        %763 = vmatprep.subr.bf16.mxu0 0
        %764 = vmatpush1.bf16.msra.mxu0 0
        %765 = vmatprep.subr.bf16.mxu0 0
        %766 = vmatpush1.bf16.msra.mxu0 0
        %767 = vmatprep.subr.bf16.mxu0 0
        %768 = vmatpush1.bf16.msra.mxu0 0
        %769 = vmatprep.subr.bf16.mxu0 0
        %770 = vmatpush1.bf16.msra.mxu0 0
        %771 = vmatprep.subr.bf16.mxu0 0
        %772 = vmatpush1.bf16.msra.mxu0 0
        %773 = vmatprep.subr.bf16.mxu0 0
        %774 = vmatpush1.bf16.msra.mxu0 0
        %775 = vmatprep.subr.bf16.mxu0 0
        %776 = vmatpush1.bf16.msra.mxu0 0
        %777 = vmatprep.subr.bf16.mxu0 0
        %778 = vmatpush1.bf16.msra.mxu0 0
        %779 = vmatprep.subr.bf16.mxu0 0
        %780 = vmatpush1.bf16.msra.mxu0 0
        %781 = vmatprep.subr.bf16.mxu0 0
        %782 = vmatpush1.bf16.msra.mxu0 0
        %783 = vmatprep.mubr.bf16.mxu0 0
        %784 = vmatmul.mubr.bf16.gmra.mrb[0].mxu0 %v749
        %v785 = vpop.f32.mrb[0].mxu0
        %v786 = vadd.f32 %v735, %v785
        %v787 = vpop.f32.mrb[0].mxu0
        %v788 = vpop.f32.mrb[0].mxu0
        %v789 = vadd.f32 %v735, %v788
        %v790 = vpop.f32.mrb[0].mxu0
        %791 = vdwg.mxu0
        %v792 = vadd.f32 %v541, %v786
        %v793 = vadd.f32 %v544, %v789
        %v794 = vsel %vm346, %v792, 0.0
        %795 = vadd.xlane.f32.xlu0 %v794
        %v796 = vpop.xlane.xlu0 %795
        %v797 = vsel %vm346, %v793, 0.0
        %798 = vadd.xlane.f32.xlu0 %v797
        %v799 = vpop.xlane.xlu0 %798
        %v800 = vrcp.pop 32.0
        %v801 = vmul.f32 %v796, %v800
        %v802 = vmul.f32 %v799, %v800
        %v803 = vsub.f32 %v792, %v801
        %v804 = vsub.f32 %v793, %v802
        %v805 = vmul.f32 %v803, %v803
        %v806 = vmul.f32 %v804, %v804
        %v807 = vsel %vm346, %v805, 0.0
        %808 = vadd.xlane.f32.xlu0 %v807
        %v809 = vpop.xlane.xlu0 %808
        %v810 = vsel %vm346, %v806, 0.0
        %811 = vadd.xlane.f32.xlu0 %v810
        %v812 = vpop.xlane.xlu0 %811
        %v813 = vmul.f32 %v809, %v800
        %v814 = vmul.f32 %v812, %v800
        %v815 = vadd.f32 %v813, 1e-05
        %v816 = vadd.f32 %v814, 1e-05
        %v817 = vrsqrt.pop %v815
        %v818 = vrsqrt.pop %v816
        %v819 = vmul.f32 %v803, %v817
        %v820 = vmul.f32 %v804, %v818
        %v821 = vlaneseq
        %v822 = vshrl.u32 %v821, 7
        %v823 = vsub.s32 0, %v822
        %v824 = vrot.slane %v329, %v823
        %v825 = vmul.f32 %v819, %v824
        %v826 = vmul.f32 %v820, %v824
        %v827 = vlaneseq
        %v828 = vshrl.u32 %v827, 7
        %v829 = vsub.s32 0, %v828
        %v830 = vrot.slane %v330, %v829
        %v831 = vadd.f32 %v825, %v830
        %v832 = vadd.f32 %v826, %v830
        %v833 = vpack.c.bf16 %v832, %v831
        %v834 = vlaneseq
        %v835 = vshrl.u32 %v834, 7
        %v836 = vsub.s32 0, %v835
        %v837 = vrot.slane %v326, %v836
        %v842 = vunpack.c.l.b16 %v306
        %v843 = vunpack.c.l.b16 %v307
        %v844 = vunpack.c.l.b16 %v308
        %v845 = vunpack.c.l.b16 %v309
        %v846 = vpack.c.b16 %v843, %v842
        %v847 = vpack.c.b16 %v845, %v844
        %v851 = vsel %vm346, %v833, 0
        %853 = vmatprep.subr.bf16.mxu0 0
        %854 = vmatpush1.bf16.msra.mxu0 %v846
        %855 = vmatprep.subr.bf16.mxu0 0
        %856 = vmatpush1.bf16.msra.mxu0 %v847
        %857 = vmatprep.subr.bf16.mxu0 0
        %858 = vmatpush1.bf16.msra.mxu0 0
        %859 = vmatprep.subr.bf16.mxu0 0
        %860 = vmatpush1.bf16.msra.mxu0 0
        %861 = vmatprep.subr.bf16.mxu0 0
        %862 = vmatpush1.bf16.msra.mxu0 0
        %863 = vmatprep.subr.bf16.mxu0 0
        %864 = vmatpush1.bf16.msra.mxu0 0
        %865 = vmatprep.subr.bf16.mxu0 0
        %866 = vmatpush1.bf16.msra.mxu0 0
        %867 = vmatprep.subr.bf16.mxu0 0
        %868 = vmatpush1.bf16.msra.mxu0 0
        %869 = vmatprep.subr.bf16.mxu0 0
        %870 = vmatpush1.bf16.msra.mxu0 0
        %871 = vmatprep.subr.bf16.mxu0 0
        %872 = vmatpush1.bf16.msra.mxu0 0
        %873 = vmatprep.subr.bf16.mxu0 0
        %874 = vmatpush1.bf16.msra.mxu0 0
        %875 = vmatprep.subr.bf16.mxu0 0
        %876 = vmatpush1.bf16.msra.mxu0 0
        %877 = vmatprep.subr.bf16.mxu0 0
        %878 = vmatpush1.bf16.msra.mxu0 0
        %879 = vmatprep.subr.bf16.mxu0 0
        %880 = vmatpush1.bf16.msra.mxu0 0
        %881 = vmatprep.subr.bf16.mxu0 0
        %882 = vmatpush1.bf16.msra.mxu0 0
        %883 = vmatprep.subr.bf16.mxu0 0
        %884 = vmatpush1.bf16.msra.mxu0 0
        %885 = vmatprep.mubr.bf16.mxu0 0
        %886 = vmatmul.mubr.bf16.gmra.mrb[0].mxu0 %v851
        %v887 = vpop.f32.mrb[0].mxu0
        %v888 = vadd.f32 %v837, %v887
        %v889 = vpop.f32.mrb[0].mxu0
        %v890 = vpop.f32.mrb[0].mxu0
        %v891 = vadd.f32 %v837, %v890
        %v892 = vpop.f32.mrb[0].mxu0
        %893 = vdwg.mxu0
        %v894 = vmax.f32 %v888, 0.0
        %v895 = vmax.f32 %v891, 0.0
        %v896 = vpack.c.bf16 %v895, %v894
        %v905 = vunpack.c.l.b16 %v310
        %v906 = vunpack.c.l.b16 %v311
        %v907 = vunpack.c.l.b16 %v312
        %v908 = vunpack.c.l.b16 %v313
        %v909 = vunpack.c.l.b16 %v314
        %v910 = vunpack.c.l.b16 %v315
        %v911 = vunpack.c.l.b16 %v316
        %v912 = vunpack.c.l.b16 %v317
        %v913 = vpack.c.b16 %v906, %v905
        %v914 = vpack.c.b16 %v908, %v907
        %v915 = vpack.c.b16 %v910, %v909
        %v916 = vpack.c.b16 %v912, %v911
        %vm921 = vcmask 523264
        %v923 = vsel %vm921, %v896, 0
        %925 = vmatprep.subr.bf16.mxu0 0
        %926 = vmatpush1.bf16.msra.mxu0 %v913
        %927 = vmatprep.subr.bf16.mxu0 0
        %928 = vmatpush1.bf16.msra.mxu0 %v914
        %929 = vmatprep.subr.bf16.mxu0 0
        %930 = vmatpush1.bf16.msra.mxu0 %v915
        %931 = vmatprep.subr.bf16.mxu0 0
        %932 = vmatpush1.bf16.msra.mxu0 %v916
        %933 = vmatprep.subr.bf16.mxu0 0
        %934 = vmatpush1.bf16.msra.mxu0 0
        %935 = vmatprep.subr.bf16.mxu0 0
        %936 = vmatpush1.bf16.msra.mxu0 0
        %937 = vmatprep.subr.bf16.mxu0 0
        %938 = vmatpush1.bf16.msra.mxu0 0
        %939 = vmatprep.subr.bf16.mxu0 0
        %940 = vmatpush1.bf16.msra.mxu0 0
        %941 = vmatprep.subr.bf16.mxu0 0
        %942 = vmatpush1.bf16.msra.mxu0 0
        %943 = vmatprep.subr.bf16.mxu0 0
        %944 = vmatpush1.bf16.msra.mxu0 0
        %945 = vmatprep.subr.bf16.mxu0 0
        %946 = vmatpush1.bf16.msra.mxu0 0
        %947 = vmatprep.subr.bf16.mxu0 0
        %948 = vmatpush1.bf16.msra.mxu0 0
        %949 = vmatprep.subr.bf16.mxu0 0
        %950 = vmatpush1.bf16.msra.mxu0 0
        %951 = vmatprep.subr.bf16.mxu0 0
        %952 = vmatpush1.bf16.msra.mxu0 0
        %953 = vmatprep.subr.bf16.mxu0 0
        %954 = vmatpush1.bf16.msra.mxu0 0
        %955 = vmatprep.subr.bf16.mxu0 0
        %956 = vmatpush1.bf16.msra.mxu0 0
        %957 = vmatprep.mubr.bf16.mxu0 0
        %958 = vmatmul.mubr.bf16.gmra.mrb[0].mxu0 %v923
        %v959 = vpop.f32.mrb[0].mxu0
        %v960 = vadd.f32 0.0, %v959
        %v961 = vpop.f32.mrb[0].mxu0
        %v962 = vpop.f32.mrb[0].mxu0
        %v963 = vadd.f32 0.0, %v962
        %v964 = vpop.f32.mrb[0].mxu0
        %965 = vdwg.mxu0
        %v966 = vadd.f32 %v831, %v960
        %v967 = vadd.f32 %v832, %v963
        %v968 = vlaneseq
        %v969 = vshrl.u32 %v968, 7
        %v970 = vsub.s32 0, %v969
        %v971 = vrot.slane %v327, %v970
        %v972 = vadd.f32 %v966, %v971
        %v973 = vadd.f32 %v967, %v971
        %v974 = vsel %vm346, %v972, 0.0
        %975 = vadd.xlane.f32.xlu0 %v974
        %v976 = vpop.xlane.xlu0 %975
        %v977 = vsel %vm346, %v973, 0.0
        %978 = vadd.xlane.f32.xlu0 %v977
        %v979 = vpop.xlane.xlu0 %978
        %v980 = vmul.f32 %v976, %v800
        %v981 = vmul.f32 %v979, %v800
        %v982 = vsub.f32 %v972, %v980
        %v983 = vsub.f32 %v973, %v981
        %v984 = vmul.f32 %v982, %v982
        %v985 = vmul.f32 %v983, %v983
        %v986 = vsel %vm346, %v984, 0.0
        %987 = vadd.xlane.f32.xlu0 %v986
        %v988 = vpop.xlane.xlu0 %987
        %v989 = vsel %vm346, %v985, 0.0
        %990 = vadd.xlane.f32.xlu0 %v989
        %v991 = vpop.xlane.xlu0 %990
        %v992 = vmul.f32 %v988, %v800
        %v993 = vmul.f32 %v991, %v800
        %v994 = vadd.f32 %v992, 1e-05
        %v995 = vadd.f32 %v993, 1e-05
        %v996 = vrsqrt.pop %v994
        %v997 = vrsqrt.pop %v995
        %v998 = vmul.f32 %v982, %v996
        %v999 = vmul.f32 %v983, %v997
        %v1000 = vlaneseq
        %v1001 = vshrl.u32 %v1000, 7
        %v1002 = vsub.s32 0, %v1001
        %v1003 = vrot.slane %v331, %v1002
        %v1004 = vmul.f32 %v998, %v1003
        %v1005 = vmul.f32 %v999, %v1003
        %v1006 = vlaneseq
        %v1007 = vshrl.u32 %v1006, 7
        %v1008 = vsub.s32 0, %v1007
        %v1009 = vrot.slane %v332, %v1008
        %v1010 = vadd.f32 %v1004, %v1009
        %v1011 = vadd.f32 %v1005, %v1009
        %v1012 = vpack.c.bf16 %v1011, %v1010
        %v1013 = vlaneseq
        %v1014 = vshrl.u32 %v1013, 7
        %v1015 = vsub.s32 0, %v1014
        %v1016 = vrot.slane %v328, %v1015
        %v1021 = vunpack.c.l.b16 %v318
        %v1022 = vunpack.c.l.b16 %v319
        %v1023 = vunpack.c.l.b16 %v320
        %v1024 = vunpack.c.l.b16 %v321
        %v1025 = vpack.c.b16 %v1022, %v1021
        %v1026 = vpack.c.b16 %v1024, %v1023
        %v1030 = vsel %vm346, %v1012, 0
        %1032 = vmatprep.subr.bf16.mxu0 0
        %1033 = vmatpush1.bf16.msra.mxu0 %v1025
        %1034 = vmatprep.subr.bf16.mxu0 0
        %1035 = vmatpush1.bf16.msra.mxu0 %v1026
        %1036 = vmatprep.subr.bf16.mxu0 0
        %1037 = vmatpush1.bf16.msra.mxu0 0
        %1038 = vmatprep.subr.bf16.mxu0 0
        %1039 = vmatpush1.bf16.msra.mxu0 0
        %1040 = vmatprep.subr.bf16.mxu0 0
        %1041 = vmatpush1.bf16.msra.mxu0 0
        %1042 = vmatprep.subr.bf16.mxu0 0
        %1043 = vmatpush1.bf16.msra.mxu0 0
        %1044 = vmatprep.subr.bf16.mxu0 0
        %1045 = vmatpush1.bf16.msra.mxu0 0
        %1046 = vmatprep.subr.bf16.mxu0 0
        %1047 = vmatpush1.bf16.msra.mxu0 0
        %1048 = vmatprep.subr.bf16.mxu0 0
        %1049 = vmatpush1.bf16.msra.mxu0 0
        %1050 = vmatprep.subr.bf16.mxu0 0
        %1051 = vmatpush1.bf16.msra.mxu0 0
        %1052 = vmatprep.subr.bf16.mxu0 0
        %1053 = vmatpush1.bf16.msra.mxu0 0
        %1054 = vmatprep.subr.bf16.mxu0 0
        %1055 = vmatpush1.bf16.msra.mxu0 0
        %1056 = vmatprep.subr.bf16.mxu0 0
        %1057 = vmatpush1.bf16.msra.mxu0 0
        %1058 = vmatprep.subr.bf16.mxu0 0
        %1059 = vmatpush1.bf16.msra.mxu0 0
        %1060 = vmatprep.subr.bf16.mxu0 0
        %1061 = vmatpush1.bf16.msra.mxu0 0
        %1062 = vmatprep.subr.bf16.mxu0 0
        %1063 = vmatpush1.bf16.msra.mxu0 0
        %1064 = vmatprep.mubr.bf16.mxu0 0
        %1065 = vmatmul.mubr.bf16.gmra.mrb[0].mxu0 %v1030
        %v1066 = vpop.f32.mrb[0].mxu0
        %v1067 = vadd.f32 %v1016, %v1066
        %v1068 = vpop.f32.mrb[0].mxu0
        %v1069 = vpop.f32.mrb[0].mxu0
        %v1070 = vadd.f32 %v1016, %v1069
        %v1071 = vpop.f32.mrb[0].mxu0
        %1072 = vdwg.mxu0
        %1073 = vst [vmem:[%s284] sm:$0xff] %v1067
        %1074 = vst [vmem:[%s284 + $0x8] sm:$0xff] %v1070
        %s1075 = sand.u32 %s127, 1
        %s1076 = scalar_lea.sflag [#allocation4], %s1075
        %s1077 = sand.u32 %s127, 1
        %s1078 = smul.addr %s1077, 16
        %s1079 = scalar_lea.vmem [#allocation10], %s1078
        // Predicated region
        $region53: #{custom_model_forward.1} parent=35 // pred_check
          %p1080 = pneg %p137
        $region54: #{custom_model_forward.1} parent=35 // pred_check_branch
          %1082 = sbr.rel (%p1080) target = $region56
        $region55: #{custom_model_forward.1} parent=35 // pred_region
          %s1084 = ssub.s32 256, 256
          %1085 = vsyncadd %s1076, %s1084
          %s1086 = smul.addr %s25, 2
          %s1087 = smul.addr %s1086, 128
          %s1088 = scalar_lea.hbm %s4, %s1087
          %s1089 = sshll.u32 %s1079, 4
          %s1090 = int_to_ptr.vmem [resolvable:$true] %s1089
          %1095 = dma.vmem_to_hbm [thread:$0]  %s1090, 256, %s1088, %s1076, 128, 128, 8
        $region56: #{custom_model_forward.1} parent=35 // pred_fallthru
          _
      $region36: #{custom_model_forward.1} parent=5 // pred_fallthru
        _
      %p1096 = scmp.le.s32.totalorder 2, %s20
      // Predicated region
      $region57: #{custom_model_forward.1} parent=5 // pred_check
        %p1097 = pneg %p1096
      $region58: #{custom_model_forward.1} parent=5 // pred_check_branch
        %1099 = sbr.rel (%p1097) target = $region60
      $region59: #{custom_model_forward.1} parent=5 // pred_region
        %s1100 = ssub.s32 %s20, 2
        // Predicated region
        $region61: #{custom_model_forward.1} parent=59 // pred_check
          %p1101 = pneg %p143
        $region62: #{custom_model_forward.1} parent=59 // pred_check_branch
          %1103 = sbr.rel (%p1101) target = $region64
        $region63: #{custom_model_forward.1} parent=59 // pred_region
          %s1104 = sand.u32 %s128, 1
          %s1105 = scalar_lea.sflag [#allocation4], %s1104
          %s1106 = sand.u32 %s128, 1
          %s1107 = smul.addr %s1106, 16
          %s1108 = scalar_lea.vmem [#allocation10], %s1107
          %1109 = dma.done %s1105, 256
        $region64: #{custom_model_forward.1} parent=59 // pred_fallthru
          _
      $region60: #{custom_model_forward.1} parent=5 // pred_fallthru
        _
    $region6: #{custom_model_forward.1} parent=1 // loop_footer
      %s24 = sadd.s32 1, %s20
    $region7: #{custom_model_forward.1} parent=1 // loop_footer_branch
      %19 = sbr.rel target = $region3
    $region8: #{custom_model_forward.1} parent=1 // loop_exit
      _
    %1110 = vsyncpa [#allocation3], 1
    %s1111 = scalar_lea.sflag [#allocation3], 1
    %1112 = vsyncpa %s1111, 1
    %1113 = vsyncpa [#allocation6], 1
    %s1114 = scalar_lea.sflag [#allocation6], 1
    %1115 = vsyncpa %s1114, 1
    %1116 = vsyncpa [#allocation9], 1
    %1117 = vsyncpa [#allocation4], 1
    %s1118 = scalar_lea.sflag [#allocation4], 1
    %1119 = vsyncpa %s1118, 1

</llo_original>
